<compile_context>
chip_gen: v5e
topology: v5e:2x2
jax: 0.10.0
libtpu: 0.0.40
codegen_flags: <defaults>
</compile_context>

<pallas_src>
import functools

import jax
import jax.numpy as jnp
from jax.experimental import pallas as pl
from jax.experimental.pallas import tpu as pltpu


def _round_up(x: int, m: int) -> int:
    return ((x + m - 1) // m) * m


def _triplet_loss_kernel(a_ref, p_ref, n_ref, o_ref, acc_ref, *,
                         margin: float, d_total: int, tile_d: int):
    i = pl.program_id(0)

    @pl.when(i == 0)
    def _init():
        acc_ref[0, 0] = jnp.float32(0.0)

    a = a_ref[...].astype(jnp.float32)   # (B, tile_d)
    p = p_ref[...].astype(jnp.float32)
    n = n_ref[...].astype(jnp.float32)

    # Elementwise (VPU) + cross-sublane reductions (XLU) over axis 0 -> (1, tile_d)
    dp = jnp.sum((a - p) * (a - p), axis=0, keepdims=True)
    dn = jnp.sum((a - n) * (a - n), axis=0, keepdims=True)

    losses = jnp.maximum(dp - dn + jnp.float32(margin), 0.0)   # relu, per lane

    # Mask lanes past D (ragged final tile / block padding) so padding never
    # leaks into the mean (relu(margin) of garbage would otherwise count).
    col = jax.lax.broadcasted_iota(jnp.int32, (1, tile_d), 1) + i * tile_d
    losses = jnp.where(col < d_total, losses, 0.0)

    # Un-normalized running sum in SMEM (scalar slot, essentially free).
    acc_ref[0, 0] += jnp.sum(losses)

    @pl.when(i == pl.num_programs(0) - 1)
    def _finalize():
        o_ref[0, 0] = acc_ref[0, 0] / jnp.float32(d_total)


def triplet_loss(anchor: jax.Array,
                 positive: jax.Array,
                 negative: jax.Array,
                 margin: float = 1.0,
                 *,
                 tile_d: int | None = None,
                 vmem_budget_bytes: int = 16 * 1024 * 1024) -> jax.Array:
    assert anchor.shape == positive.shape == negative.shape
    assert anchor.ndim == 2, "expected (B, D) inputs"
    B, D = anchor.shape

    if tile_d is None:
        # 3 inputs x 2 pipeline buffers x (B, tile_d) blocks must fit the budget
        # (budget chosen to be safe on v7x's 64 MiB VMEM as well as v5e/v6e).
        itemsize = jnp.dtype(anchor.dtype).itemsize
        bytes_per_lane = 3 * 2 * B * itemsize
        max_lanes = max(128, vmem_budget_bytes // max(bytes_per_lane, 1))
        tile_d = min(_round_up(D, 128), (max_lanes // 128) * 128, 2048)
        tile_d = max(tile_d, 128)
    assert tile_d % 128 == 0, "TILE_D must be a multiple of 128"

    num_tiles = pl.cdiv(D, tile_d)

    kernel = functools.partial(
        _triplet_loss_kernel, margin=float(margin), d_total=D, tile_d=tile_d)

    in_spec = pl.BlockSpec((B, tile_d), lambda i: (0, i))

    out = pl.pallas_call(
        kernel,
        out_shape=jax.ShapeDtypeStruct((1, 1), jnp.float32),
        grid=(num_tiles,),
        in_specs=[in_spec, in_spec, in_spec],
        out_specs=pl.BlockSpec(memory_space=pltpu.MemorySpace.SMEM),
        scratch_shapes=[pltpu.SMEM((1, 1), jnp.float32)],
        compiler_params=pltpu.CompilerParams(
            dimension_semantics=("arbitrary",),       # carries the accumulator
            vmem_limit_bytes=32 * 1024 * 1024,        # raise v5e's 16 MiB default
        ),
    )(anchor, positive, negative)

    return out[0, 0]   # scalar, matches torch's 0-dim tensor result


def _reference(anchor, positive, negative, margin=1.0):
    a = anchor.astype(jnp.float32)
    p = positive.astype(jnp.float32)
    n = negative.astype(jnp.float32)
    dp = jnp.sum((a - p) ** 2, axis=0)
    dn = jnp.sum((a - n) ** 2, axis=0)
    return jnp.mean(jnp.maximum(dp - dn + jnp.float32(margin), 0.0))


if __name__ == "__main__":
    key = jax.random.PRNGKey(0)

    def check(B, D, margin, dtype=jnp.float32, tile_d=None, tol=1e-5):
        k = jax.random.fold_in(key, B * 1000 + D)
        k_a, k_p, k_n = jax.random.split(k, 3)
        a = jax.random.normal(k_a, (B, D), dtype=dtype)
        p = jax.random.normal(k_p, (B, D), dtype=dtype)
        n = jax.random.normal(k_n, (B, D), dtype=dtype)

        loss = triplet_loss(a, p, n, margin=margin, tile_d=tile_d)
        jax.block_until_ready(loss)

        ref = _reference(a, p, n, margin=margin)
        assert jnp.allclose(loss, ref, rtol=tol, atol=tol), (B, D, dtype, loss, ref)

    # Original toy shape: single tile (pure launch overhead at this size; the
    # tiling pays off only for large B*D).
    check(8, 128, 1.0)
    # Ragged D: exercises the lane mask on the (only) partial tile.
    check(8, 300, 1.0)
    # Multi-tile grid: SMEM accumulator carried across 5 grid steps (ragged tail).
    check(16, 1152, 0.5, tile_d=256)
    # bf16 inputs: half the HBM bytes, f32 accumulation inside the kernel.
    check(8, 384, 1.0, dtype=jnp.bfloat16, tile_d=128, tol=1e-4)

    print("KERNEL_OK")
</pallas_src>

<mosaic_0001>
module attributes {stable_mosaic.version = 11 : i64} {
  func.func @_triplet_loss_kernel(%arg0: i32, %arg1: memref<8x128xf32, #tpu.memory_space<vmem>>, %arg2: memref<8x128xf32, #tpu.memory_space<vmem>>, %arg3: memref<8x128xf32, #tpu.memory_space<vmem>>, %arg4: memref<1x1xf32, #tpu.memory_space<smem>>, %arg5: memref<1x1xf32, #tpu.memory_space<smem>>) attributes {dimension_semantics = [#tpu.dimension_semantics<arbitrary>], iteration_bounds = array<i64: 1>, scalar_prefetch = 0 : i64, scratch_operands = 1 : i64, tpu.core_type = #tpu.core_type<tc>, window_params = [{transform_indices = @transform_0, window_bounds = array<i64: 8, 128>}, {transform_indices = @transform_1, window_bounds = array<i64: 8, 128>}, {transform_indices = @transform_2, window_bounds = array<i64: 8, 128>}, {transform_indices = @transform_3, window_bounds = array<i64: 1, 1>}]} {
    %c0_i32 = arith.constant 0 : i32
    %0 = arith.cmpi eq, %arg0, %c0_i32 : i32
    %1 = arith.extui %0 : i1 to i32
    %c0_i32_0 = arith.constant 0 : i32
    %2 = arith.cmpi ne, %1, %c0_i32_0 : i32
    scf.if %2 {
      %cst_18 = arith.constant 0.000000e+00 : f32
      %c0_19 = arith.constant 0 : index
      %c0_20 = arith.constant 0 : index
      %39 = memref.load %arg5[%c0_19, %c0_20] : memref<1x1xf32, #tpu.memory_space<smem>>
      memref.store %cst_18, %arg5[%c0_19, %c0_20] : memref<1x1xf32, #tpu.memory_space<smem>>
    } else {
    }
    %c0 = arith.constant 0 : index
    %c0_1 = arith.constant 0 : index
    %3 = vector.load %arg1[%c0, %c0_1] : memref<8x128xf32, #tpu.memory_space<vmem>>, vector<8x128xf32>
    %c0_2 = arith.constant 0 : index
    %c0_3 = arith.constant 0 : index
    %4 = vector.load %arg2[%c0_2, %c0_3] : memref<8x128xf32, #tpu.memory_space<vmem>>, vector<8x128xf32>
    %c0_4 = arith.constant 0 : index
    %c0_5 = arith.constant 0 : index
    %5 = vector.load %arg3[%c0_4, %c0_5] : memref<8x128xf32, #tpu.memory_space<vmem>>, vector<8x128xf32>
    %6 = arith.subf %3, %4 : vector<8x128xf32>
    %7 = arith.subf %3, %4 : vector<8x128xf32>
    %8 = arith.mulf %6, %7 : vector<8x128xf32>
    %cst = arith.constant dense<0.000000e+00> : vector<128xf32>
    %9 = vector.multi_reduction <add>, %8, %cst [0] : vector<8x128xf32> to vector<128xf32>
    %10 = vector.shape_cast %9 : vector<128xf32> to vector<1x128xf32>
    %11 = arith.subf %3, %5 : vector<8x128xf32>
    %12 = arith.subf %3, %5 : vector<8x128xf32>
    %13 = arith.mulf %11, %12 : vector<8x128xf32>
    %cst_6 = arith.constant dense<0.000000e+00> : vector<128xf32>
    %14 = vector.multi_reduction <add>, %13, %cst_6 [0] : vector<8x128xf32> to vector<128xf32>
    %15 = vector.shape_cast %14 : vector<128xf32> to vector<1x128xf32>
    %16 = arith.subf %10, %15 : vector<1x128xf32>
    %cst_7 = arith.constant 1.000000e+00 : f32
    %17 = vector.broadcast %cst_7 : f32 to vector<1x128xf32>
    %18 = arith.addf %16, %17 : vector<1x128xf32>
    %cst_8 = arith.constant 0.000000e+00 : f32
    %19 = vector.broadcast %cst_8 : f32 to vector<1x128xf32>
    %20 = arith.maximumf %18, %19 : vector<1x128xf32>
    %21 = tpu.iota {dimensions = array<i32: 1>} : vector<1x128xi32>
    %c128_i32 = arith.constant 128 : i32
    %22 = arith.muli %arg0, %c128_i32 : i32
    %23 = vector.broadcast %22 : i32 to vector<1x128xi32>
    %24 = arith.addi %21, %23 : vector<1x128xi32>
    %c128_i32_9 = arith.constant 128 : i32
    %25 = vector.broadcast %c128_i32_9 : i32 to vector<1x128xi32>
    %26 = arith.cmpi slt, %24, %25 : vector<1x128xi32>
    %cst_10 = arith.constant 0.000000e+00 : f32
    %27 = vector.broadcast %cst_10 : f32 to vector<1x128xf32>
    %28 = arith.select %26, %20, %27 : vector<1x128xi1>, vector<1x128xf32>
    %c0_11 = arith.constant 0 : index
    %c0_12 = arith.constant 0 : index
    %29 = memref.load %arg5[%c0_11, %c0_12] : memref<1x1xf32, #tpu.memory_space<smem>>
    %30 = vector.shape_cast %28 : vector<1x128xf32> to vector<1x1x128xf32>
    %cst_13 = arith.constant dense<0.000000e+00> : vector<1xf32>
    %31 = vector.multi_reduction <add>, %30, %cst_13 [1, 2] : vector<1x1x128xf32> to vector<1xf32>
    %32 = vector.shape_cast %31 : vector<1xf32> to vector<1x1x1xf32>
    %33 = vector.extract %32[0, 0, 0] : f32 from vector<1x1x1xf32>
    %34 = arith.addf %29, %33 : f32
    %c0_14 = arith.constant 0 : index
    %c0_15 = arith.constant 0 : index
    %35 = memref.load %arg5[%c0_14, %c0_15] : memref<1x1xf32, #tpu.memory_space<smem>>
    memref.store %34, %arg5[%c0_14, %c0_15] : memref<1x1xf32, #tpu.memory_space<smem>>
    %c0_i32_16 = arith.constant 0 : i32
    %36 = arith.cmpi eq, %arg0, %c0_i32_16 : i32
    %37 = arith.extui %36 : i1 to i32
    %c0_i32_17 = arith.constant 0 : i32
    %38 = arith.cmpi ne, %37, %c0_i32_17 : i32
    scf.if %38 {
      %c0_18 = arith.constant 0 : index
      %c0_19 = arith.constant 0 : index
      %39 = memref.load %arg5[%c0_18, %c0_19] : memref<1x1xf32, #tpu.memory_space<smem>>
      %cst_20 = arith.constant 1.280000e+02 : f32
      %40 = arith.divf %39, %cst_20 : f32
      %c0_21 = arith.constant 0 : index
      %c0_22 = arith.constant 0 : index
      %41 = memref.load %arg4[%c0_21, %c0_22] : memref<1x1xf32, #tpu.memory_space<smem>>
      memref.store %40, %arg4[%c0_21, %c0_22] : memref<1x1xf32, #tpu.memory_space<smem>>
    } else {
    }
    return
  }
  func.func @transform_0(%arg0: i32) -> (i32, i32) {
    %c0_i32 = arith.constant 0 : i32
    %c0_i32_0 = arith.constant 0 : i32
    return %c0_i32, %arg0 : i32, i32
  }
  func.func @transform_1(%arg0: i32) -> (i32, i32) {
    %c0_i32 = arith.constant 0 : i32
    %c0_i32_0 = arith.constant 0 : i32
    return %c0_i32, %arg0 : i32, i32
  }
  func.func @transform_2(%arg0: i32) -> (i32, i32) {
    %c0_i32 = arith.constant 0 : i32
    %c0_i32_0 = arith.constant 0 : i32
    return %c0_i32, %arg0 : i32, i32
  }
  func.func @transform_3(%arg0: i32) -> (i32, i32) {
    %c0_i32 = arith.constant 0 : i32
    %c0_i32_0 = arith.constant 0 : i32
    %c0_i32_1 = arith.constant 0 : i32
    return %c0_i32, %c0_i32_0 : i32, i32
  }
}

</mosaic_0001>

<llo_original>
// kernel: tpu_custom_call.1
$region0: #{tpu_custom_call.1}
  #allocation0 [shape = 'u32[]', space=smem, size = 0x4, offset = 0x4, fixed_abs, tag = 'smem constant byte address 0x4 - core index']
  #allocation1 [shape = 'u32[72,128]{1,0:T(1,128)}', space=vmem, size = 0x9000, scoped, tag = 'internal scratch']
  #allocation2 [shape = 'f32[1,1]{1,0:T(1,128)}', space=smem, size = 0x200, scoped, tag = 'scratch operand']
  %s0 = inlined_call_operand.hbm [shape: f32[8,128], index: 0, kind: input, shape index: {}]
  %s1 = inlined_call_operand.hbm [shape: f32[8,128], index: 1, kind: input, shape index: {}]
  %s2 = inlined_call_operand.hbm [shape: f32[8,128], index: 2, kind: input, shape index: {}]
  %s3 = inlined_call_operand.hbm [shape: f32[1,1], index: 3, kind: output, shape index: {}]
  %s4 = sld [smem:[#allocation0]]
  $region42: #{tpu_custom_call.1} parent=0
    _
  %s6 = ssub.s32 1, %s4
  %s7 = scalar_select 0, %s6, %s4
  $region1: #{tpu_custom_call.1} parent=0
    #allocation3 [shape = 'u8[4096]{0}', space=vmem, size = 0x1000, scoped, tag = 'input window, operand 0, single buffered']
    #allocation4 [shape = 's32[1]{0}', space=sflag, size = 0x4, scoped, tag = 'scoped memory for tpu_custom_call.1']
    #allocation5 [shape = 's32[1]{0}', space=sflag, size = 0x4, scoped, tag = 'scoped memory for tpu_custom_call.1']
    #allocation6 [shape = 'u8[4096]{0}', space=vmem, size = 0x1000, scoped, tag = 'input window, operand 1, single buffered']
    #allocation7 [shape = 's32[1]{0}', space=sflag, size = 0x4, scoped, tag = 'scoped memory for tpu_custom_call.1']
    #allocation8 [shape = 'u8[4096]{0}', space=vmem, size = 0x1000, scoped, tag = 'input window, operand 2, single buffered']
    #allocation9 [shape = 'u8[512]{0}', space=smem, size = 0x200, scoped, tag = 'output window, operand 0, single buffered']
    %8 = vsyncpa [#allocation4], 0
    %9 = vsyncpa [#allocation7], 0
    %10 = vsyncpa [#allocation5], 0
    // Predicated region
    $region2: #{tpu_custom_call.1} parent=1 // pred_check
      _
    $region3: #{tpu_custom_call.1} parent=1 // pred_check_branch
      %12 = sbr.rel (0) target = $region5
    $region4: #{tpu_custom_call.1} parent=1 // pred_region
      %14 = vsyncadd [#allocation4], 0
      %s16 = sshll.u32 %s0, 4
      %s17 = int_to_ptr.hbm [resolvable:$true] %s16
      %s18 = sshll.u32 [#allocation3], 4
      %s19 = int_to_ptr.vmem [resolvable:$true] %s18
      %21 = dma.hbm_to_vmem [thread:$0]  %s17, 128, %s19, [#allocation4]
    $region5: #{tpu_custom_call.1} parent=1 // pred_fallthru
      _
    // Predicated region
    $region6: #{tpu_custom_call.1} parent=1 // pred_check
      _
    $region7: #{tpu_custom_call.1} parent=1 // pred_check_branch
      %23 = sbr.rel (0) target = $region9
    $region8: #{tpu_custom_call.1} parent=1 // pred_region
      %25 = vsyncadd [#allocation7], 0
      %s27 = sshll.u32 %s1, 4
      %s28 = int_to_ptr.hbm [resolvable:$true] %s27
      %s29 = sshll.u32 [#allocation6], 4
      %s30 = int_to_ptr.vmem [resolvable:$true] %s29
      %32 = dma.hbm_to_vmem [thread:$0]  %s28, 128, %s30, [#allocation7]
    $region9: #{tpu_custom_call.1} parent=1 // pred_fallthru
      _
    // Predicated region
    $region10: #{tpu_custom_call.1} parent=1 // pred_check
      _
    $region11: #{tpu_custom_call.1} parent=1 // pred_check_branch
      %34 = sbr.rel (0) target = $region13
    $region12: #{tpu_custom_call.1} parent=1 // pred_region
      %36 = vsyncadd [#allocation7], 0
      %s38 = sshll.u32 %s2, 4
      %s39 = int_to_ptr.hbm [resolvable:$true] %s38
      %s40 = sshll.u32 [#allocation8], 4
      %s41 = int_to_ptr.vmem [resolvable:$true] %s40
      %43 = dma.hbm_to_vmem [thread:$0]  %s39, 128, %s41, [#allocation7]
    $region13: #{tpu_custom_call.1} parent=1 // pred_fallthru
      _
    // Predicated region
    $region14: #{tpu_custom_call.1} parent=1 // pred_check
      _
    $region15: #{tpu_custom_call.1} parent=1 // pred_check_branch
      %45 = sbr.rel (0) target = $region17
    $region16: #{tpu_custom_call.1} parent=1 // pred_region
      %47 = dma.done [#allocation4], 128
    $region17: #{tpu_custom_call.1} parent=1 // pred_fallthru
      _
    // Predicated region
    $region18: #{tpu_custom_call.1} parent=1 // pred_check
      _
    $region19: #{tpu_custom_call.1} parent=1 // pred_check_branch
      %49 = sbr.rel (0) target = $region21
    $region20: #{tpu_custom_call.1} parent=1 // pred_region
      %51 = dma.done [#allocation7], 128
    $region21: #{tpu_custom_call.1} parent=1 // pred_fallthru
      _
    // Predicated region
    $region22: #{tpu_custom_call.1} parent=1 // pred_check
      _
    $region23: #{tpu_custom_call.1} parent=1 // pred_check_branch
      %53 = sbr.rel (0) target = $region25
    $region24: #{tpu_custom_call.1} parent=1 // pred_region
      %55 = dma.done [#allocation7], 128
    $region25: #{tpu_custom_call.1} parent=1 // pred_fallthru
      _
    %p56 = scmp.eq.s32.totalorder 0, 0
    // Predicated region
    $region26: #{tpu_custom_call.1} parent=1 // pred_check
      %p57 = pneg %p56
    $region27: #{tpu_custom_call.1} parent=1 // pred_check_branch
      %59 = sbr.rel (%p57) target = $region29
    $region28: #{tpu_custom_call.1} parent=1 // pred_region
      %s60 = scalar_lea.smem [#allocation2], 0
      %61 = sst [smem:[%s60]] 0.0
    $region29: #{tpu_custom_call.1} parent=1 // pred_fallthru
      _
    %v62 = vld [vmem:[#allocation3] sm:$0xff]
    %v63 = vld [vmem:[#allocation6] sm:$0xff]
    %v64 = vld [vmem:[#allocation8] sm:$0xff]
    %v65 = vsub.f32 %v62, %v63
    %v66 = vmul.f32 %v65, %v65
    %v67 = vrot.slane %v66, 4
    %v68 = vadd.f32 %v66, %v67
    %v69 = vrot.slane %v68, 2
    %v70 = vadd.f32 %v68, %v69
    %v71 = vrot.slane %v70, 1
    %v72 = vadd.f32 %v70, %v71
    %v73 = vsub.f32 %v62, %v64
    %v74 = vmul.f32 %v73, %v73
    %v75 = vrot.slane %v74, 4
    %v76 = vadd.f32 %v74, %v75
    %v77 = vrot.slane %v76, 2
    %v78 = vadd.f32 %v76, %v77
    %v79 = vrot.slane %v78, 1
    %v80 = vadd.f32 %v78, %v79
    %v81 = vsub.f32 %v72, %v80
    %v82 = vadd.f32 %v81, 1.0
    %v83 = vmax.f32 %v82, 0.0
    %v84 = vlaneseq
    %v85 = vand.u32 %v84, 127
    %s86 = smul.u32 0, 128
    %v87 = vstv %s86
    %v88 = vadd.s32 %v85, %v87
    %vm89 = vcmp.lt.s32.totalorder %v88, 128
    %v90 = vsel %vm89, %v83, 0.0
    %s91 = sld [smem:[#allocation2]]
    %vm92 = vcmask 1040384
    %v93 = vsel %vm92, %v90, 0.0
    %94 = vadd.xlane.f32.xlu0 %v93
    %v95 = vpop.xlane.xlu0 %94
    %v96 = vrot.slane %v95, 4
    %v97 = vadd.f32 %v95, %v96
    %v98 = vrot.slane %v97, 2
    %v99 = vadd.f32 %v97, %v98
    %v100 = vrot.slane %v99, 1
    %v101 = vadd.f32 %v99, %v100
    %s102 = vtos %v101
    %s103 = sadd.f32 %s91, %s102
    %s104 = scalar_lea.smem [#allocation2], 0
    %105 = sst [smem:[%s104]] %s103
    // Predicated region
    $region30: #{tpu_custom_call.1} parent=1 // pred_check
      %p106 = pneg %p56
    $region31: #{tpu_custom_call.1} parent=1 // pred_check_branch
      %108 = sbr.rel (%p106) target = $region33
    $region32: #{tpu_custom_call.1} parent=1 // pred_region
      %s109 = sld [smem:[#allocation2]]
      %v110 = vrcp.pop 128.0
      %v111 = vmul.f32 128.0, %v110
      %v112 = vsub.f32 1.0, %v111
      %v113 = vmul.f32 %v110, %v112
      %v114 = vadd.f32 %v110, %v113
      %vm115 = vweird.f32 %v110
      %v116 = vsel %vm115, %v110, %v114
      %s117 = vtos %v116
      %s118 = smul.f32 %s109, %s117
      %s119 = scalar_lea.smem [#allocation9], 0
      %120 = sst [smem:[%s119]] %s118
    $region33: #{tpu_custom_call.1} parent=1 // pred_fallthru
      _
    // Predicated region
    $region34: #{tpu_custom_call.1} parent=1 // pred_check
      _
    $region35: #{tpu_custom_call.1} parent=1 // pred_check_branch
      %122 = sbr.rel (0) target = $region37
    $region36: #{tpu_custom_call.1} parent=1 // pred_region
      %124 = vsyncadd [#allocation5], 0
      %s126 = sshll.u32 %s3, 4
      %s127 = int_to_ptr.hbm [resolvable:$true] %s126
      %129 = dma.smem_to_hbm [#allocation9], 16, %s127, [#allocation5]
    $region37: #{tpu_custom_call.1} parent=1 // pred_fallthru
      _
    // Predicated region
    $region38: #{tpu_custom_call.1} parent=1 // pred_check
      _
    $region39: #{tpu_custom_call.1} parent=1 // pred_check_branch
      %131 = sbr.rel (0) target = $region41
    $region40: #{tpu_custom_call.1} parent=1 // pred_region
      %133 = dma.done [#allocation5], 16
    $region41: #{tpu_custom_call.1} parent=1 // pred_fallthru
      _
    %134 = sfence
    %135 = vsyncpa [#allocation4], 1
    %136 = vsyncpa [#allocation7], 1
    %137 = vsyncpa [#allocation5], 1

</llo_original>
